<compile_context>
chip_gen: v7x
topology: tpu7x:2x2x1
jax: 0.10.0
libtpu: 0.0.40
codegen_flags: <defaults>
</compile_context>

<pallas_src>
import functools

import jax
import jax.numpy as jnp
from jax.experimental import pallas as pl
from jax.experimental.pallas import tpu as pltpu


# --------------------------------------------------------------------------- #
# Kernel
# --------------------------------------------------------------------------- #
def bert_sa_head_kernel(h_ref, w_ref, b_ref, o_ref, acc_ref, *, seq_len):
    # h_ref:  [TB, TS, H] input tile (f32 or bf16)
    # w_ref:  [H, L] pre-transposed linear weight (f32, VMEM-resident)
    # b_ref:  [1, L] bias
    # o_ref:  [TB, L] output (resident across the sequence-reduction axis)
    # acc_ref:[TB, H] f32 VMEM accumulator (running sum over the sequence)
    s = pl.program_id(1)

    @pl.when(s == 0)
    def _():
        acc_ref[...] = jnp.zeros_like(acc_ref)

    # Partial sum of this sequence tile (VPU adds, always f32 accumulation).
    acc_ref[...] += jnp.sum(h_ref[...].astype(jnp.float32), axis=1)

    @pl.when(s == pl.num_programs(1) - 1)
    def _():
        # avg_pool2d over the full sequence == sum / S (divide once, at finalize).
        pooled = acc_ref[...] * (1.0 / float(seq_len))            # [TB, H]
        # Linear: pooled @ W + b (tiny matmul, once per batch tile; hidden
        # under the streaming DMA so MXU under-utilization is irrelevant).
        logits = jnp.dot(pooled, w_ref[...],
                         preferred_element_type=jnp.float32)      # [TB, L]
        logits = logits + b_ref[...]                              # broadcast [1, L]
        # Numerically stable log-softmax over the label axis.
        m = jnp.max(logits, axis=-1, keepdims=True)
        z = logits - m
        lse = jnp.log(jnp.sum(jnp.exp(z), axis=-1, keepdims=True))
        o_ref[...] = (z - lse).astype(o_ref.dtype)


# --------------------------------------------------------------------------- #
# Tile selection (dtype- and VMEM-budget-aware)
# --------------------------------------------------------------------------- #
def _sublane_multiple(dtype):
    """Minimum multiple for the second-to-last block dim given element width."""
    itemsize = jnp.dtype(dtype).itemsize
    return {4: 8, 2: 16, 1: 32}.get(itemsize, 8)


def _pick_seq_tile(S, mult, max_ts):
    """Largest divisor of S that is <= max_ts and a multiple of `mult`
    (or equal to the full sequence, which is always a legal block)."""
    for ts in range(min(S, max(max_ts, 1)), 0, -1):
        if S % ts:
            continue
        if ts == S or ts % mult == 0:
            return ts
    return S  # fallback: full sequence (always layout-legal)


def _pick_batch_tile(B, per_row_bytes, budget_bytes, min_blocks):
    """Largest divisor of B (multiple of 8, or == B) whose hidden tile fits the
    VMEM budget, keeping >= min_blocks batch blocks when possible (v7x megacore)."""
    cands = [t for t in range(B, 0, -1)
             if B % t == 0 and (t % 8 == 0 or t == B)]
    for t in cands:                                   # respect min_blocks first
        if t * per_row_bytes <= budget_bytes and (B // t) >= min_blocks:
            return t
    for t in cands:                                   # then just fit the budget
        if t * per_row_bytes <= budget_bytes:
            return t
    return cands[-1] if cands else 1


# --------------------------------------------------------------------------- #
# Wrapper
# --------------------------------------------------------------------------- #
def bert_sa_head(last_hidden_state, weight_t, bias, *,
                 ts_target=None, tb_target=None,
                 buffer_budget_bytes=12 << 20):
    """last_hidden_state: [B, S, H] (f32 or bf16); weight_t: [H, L]; bias: [L].

    bf16 hidden states are preferred (half the HBM traffic of the streaming
    pooling loop); accumulation is always f32 so numerics are unchanged.
    """
    B, S, H = last_hidden_state.shape
    L = weight_t.shape[1]
    bias2d = bias.reshape(1, L).astype(jnp.float32)
    weight_t = weight_t.astype(jnp.float32)

    in_itemsize = jnp.dtype(last_hidden_state.dtype).itemsize
    mult = _sublane_multiple(last_hidden_state.dtype)

    # Sequence tile: grow toward the full sequence first (fewer grid steps,
    # single long contiguous ts*H DMA run per batch element).
    max_ts_for_budget = max(buffer_budget_bytes // max(H * in_itemsize, 1), 1)
    ts_cap = min(S, ts_target) if ts_target is not None else S
    ts = _pick_seq_tile(S, mult, min(ts_cap, max_ts_for_budget))

    # Batch tile: fill the remaining per-buffer budget, but keep >= 2 batch
    # blocks when possible so the "parallel" axis feeds both v7x TensorCores.
    per_row_bytes = ts * H * in_itemsize
    tb_budget = buffer_budget_bytes if tb_target is None \
        else min(buffer_budget_bytes, max(tb_target, 1) * per_row_bytes)
    tb = _pick_batch_tile(B, per_row_bytes, tb_budget, min_blocks=min(2, B))

    grid = (B // tb, S // ts)

    # Scoped-VMEM requirement: double-buffered hidden tile + resident weight/
    # bias/output/accumulator. The 12 MiB-per-buffer default keeps this under
    # ~28 MiB (fits v7x's 64 MiB physical VMEM); raise the limit explicitly so
    # v5e's 16 MiB scoped default never gates the bigger-tile win.
    hidden_buf = tb * ts * H * in_itemsize
    needed = (2 * hidden_buf                 # double-buffered input tile
              + 2 * H * L * 4 + 2 * L * 4    # weight + bias (double-buffered)
              + 2 * tb * L * 4               # output tile
              + tb * H * 4)                  # f32 accumulator scratch
    vmem_limit = min(max(int(needed * 1.25) + (2 << 20), 32 << 20), 56 << 20)

    # Memory-bound cost hint for XLA's scheduler around the custom call.
    cost = pl.CostEstimate(
        flops=int(B * S * H + 2 * B * H * L + 4 * B * L),
        transcendentals=int(B * L),
        bytes_accessed=int(B * S * H * in_itemsize + H * L * 4 + L * 4
                           + B * L * 4),
    )

    kernel = functools.partial(bert_sa_head_kernel, seq_len=S)

    return pl.pallas_call(
        kernel,
        out_shape=jax.ShapeDtypeStruct((B, L), jnp.float32),
        grid_spec=pltpu.PrefetchScalarGridSpec(
            num_scalar_prefetch=0,
            grid=grid,
            in_specs=[
                # Hidden-state tile, streamed over (batch, seq).
                pl.BlockSpec((tb, ts, H), lambda b, s: (b, s, 0)),
                # Weight / bias: constant index_map -> stay VMEM-resident.
                pl.BlockSpec((H, L), lambda b, s: (0, 0)),
                pl.BlockSpec((1, L), lambda b, s: (0, 0)),
            ],
            # Output indexed only by the batch axis: resident across the
            # sequence reduction, written back once per batch tile.
            out_specs=pl.BlockSpec((tb, L), lambda b, s: (b, 0)),
            scratch_shapes=[pltpu.VMEM((tb, H), jnp.float32)],
        ),
        compiler_params=pltpu.CompilerParams(
            dimension_semantics=("parallel", "arbitrary"),
            vmem_limit_bytes=vmem_limit),
        cost_estimate=cost,
    )(last_hidden_state, weight_t, bias2d)


def reference(last_hidden_state, weight_t, bias):
    pooled = jnp.mean(last_hidden_state.astype(jnp.float32), axis=1)
    logits = pooled @ weight_t.astype(jnp.float32) + bias[None, :]
    return jax.nn.log_softmax(logits, axis=-1)


# --------------------------------------------------------------------------- #
# Demo / correctness check (small shapes; real BERT: H=768, S<=128, L=num_labels)
# --------------------------------------------------------------------------- #
if __name__ == "__main__":
    B, S, H, L = 16, 32, 128, 8

    key = jax.random.PRNGKey(0)
    k_h, k_w, k_b = jax.random.split(key, 3)

    # Synthetic "last_hidden_state" standing in for bert(**input_ids).
    h_f32 = jax.random.normal(k_h, (B, S, H), dtype=jnp.float32)
    h_bf16 = h_f32.astype(jnp.bfloat16)   # preferred input dtype (half HBM traffic)

    # nn.Linear(H, L) parameters, deterministic uniform init (PyTorch-style bound).
    bound = 1.0 / jnp.sqrt(jnp.float32(H))
    weight = jax.random.uniform(k_w, (L, H), jnp.float32, -bound, bound)  # [L, H]
    bias = jax.random.uniform(k_b, (L,), jnp.float32, -bound, bound)
    weight_t = jnp.asarray(weight.T)                                      # [H, L]

    # 1) bf16 input, auto tiling (ts = full sequence, >=2 batch blocks -> grid (2, 1)).
    out_bf16 = jax.block_until_ready(bert_sa_head(h_bf16, weight_t, bias))
    ref_bf16 = reference(h_bf16, weight_t, bias)
    assert out_bf16.shape == (B, L)
    assert jnp.allclose(out_bf16, ref_bf16, atol=1e-5, rtol=1e-5), (out_bf16, ref_bf16)

    # 2) bf16 input, forced small sequence tile (ts=16, multiple of 16 for bf16)
    #    -> exercises the multi-step reduction / accumulator path (grid (2, 2)).
    out_small = jax.block_until_ready(
        bert_sa_head(h_bf16, weight_t, bias, ts_target=16))
    assert jnp.allclose(out_small, ref_bf16, atol=1e-5, rtol=1e-5), (out_small, ref_bf16)

    # 3) f32 input path (dtype-aware tiling falls back to multiples of 8).
    out_f32 = jax.block_until_ready(bert_sa_head(h_f32, weight_t, bias))
    ref_f32 = reference(h_f32, weight_t, bias)
    assert jnp.allclose(out_f32, ref_f32, atol=1e-5, rtol=1e-5), (out_f32, ref_f32)

    print("KERNEL_OK")
</pallas_src>

<mosaic_0001>
module attributes {stable_mosaic.version = 11 : i64} {
  func.func @bert_sa_head_kernel(%arg0: i32, %arg1: i32, %arg2: memref<8x32x128xbf16, #tpu.memory_space<vmem>>, %arg3: memref<128x8xf32, #tpu.memory_space<vmem>>, %arg4: memref<1x8xf32, #tpu.memory_space<vmem>>, %arg5: memref<8x8xf32, #tpu.memory_space<vmem>>, %arg6: memref<8x128xf32, #tpu.memory_space<vmem>>) attributes {dimension_semantics = [#tpu.dimension_semantics<parallel>, #tpu.dimension_semantics<arbitrary>], iteration_bounds = array<i64: 2, 1>, scalar_prefetch = 0 : i64, scratch_operands = 1 : i64, tpu.core_type = #tpu.core_type<tc>, window_params = [{transform_indices = @transform_0, window_bounds = array<i64: 8, 32, 128>}, {pipeline_mode = #tpu.pipeline_mode<synchronous>, transform_indices = @transform_1, window_bounds = array<i64: 128, 8>}, {pipeline_mode = #tpu.pipeline_mode<synchronous>, transform_indices = @transform_2, window_bounds = array<i64: 1, 8>}, {transform_indices = @transform_3, window_bounds = array<i64: 8, 8>}]} {
    %c0_i32 = arith.constant 0 : i32
    %0 = arith.cmpi eq, %arg1, %c0_i32 : i32
    %1 = arith.extui %0 : i1 to i32
    %c0_i32_0 = arith.constant 0 : i32
    %2 = arith.cmpi ne, %1, %c0_i32_0 : i32
    scf.if %2 {
      %cst_9 = arith.constant 0.000000e+00 : f32
      %12 = vector.broadcast %cst_9 : f32 to vector<8x128xf32>
      %c0_10 = arith.constant 0 : index
      %c0_11 = arith.constant 0 : index
      %13 = vector.load %arg6[%c0_10, %c0_11] : memref<8x128xf32, #tpu.memory_space<vmem>>, vector<8x128xf32>
      tpu.vector_store %arg6[%c0_10, %c0_11], %12 {strides = array<i32>} : memref<8x128xf32, #tpu.memory_space<vmem>>, vector<8x128xf32>,
    } else {
    }
    %c0 = arith.constant 0 : index
    %c0_1 = arith.constant 0 : index
    %3 = vector.load %arg6[%c0, %c0_1] : memref<8x128xf32, #tpu.memory_space<vmem>>, vector<8x128xf32>
    %c0_2 = arith.constant 0 : index
    %c0_3 = arith.constant 0 : index
    %c0_4 = arith.constant 0 : index
    %4 = vector.load %arg2[%c0_2, %c0_3, %c0_4] : memref<8x32x128xbf16, #tpu.memory_space<vmem>>, vector<8x32x128xbf16>
    %5 = arith.extf %4 : vector<8x32x128xbf16> to vector<8x32x128xf32>
    %cst = arith.constant dense<0.000000e+00> : vector<8x128xf32>
    %6 = vector.multi_reduction <add>, %5, %cst [1] : vector<8x32x128xf32> to vector<8x128xf32>
    %7 = arith.addf %3, %6 : vector<8x128xf32>
    %c0_5 = arith.constant 0 : index
    %c0_6 = arith.constant 0 : index
    %8 = vector.load %arg6[%c0_5, %c0_6] : memref<8x128xf32, #tpu.memory_space<vmem>>, vector<8x128xf32>
    tpu.vector_store %arg6[%c0_5, %c0_6], %7 {strides = array<i32>} : memref<8x128xf32, #tpu.memory_space<vmem>>, vector<8x128xf32>,
    %c0_i32_7 = arith.constant 0 : i32
    %9 = arith.cmpi eq, %arg1, %c0_i32_7 : i32
    %10 = arith.extui %9 : i1 to i32
    %c0_i32_8 = arith.constant 0 : i32
    %11 = arith.cmpi ne, %10, %c0_i32_8 : i32
    scf.if %11 {
      %c0_9 = arith.constant 0 : index
      %c0_10 = arith.constant 0 : index
      %12 = vector.load %arg6[%c0_9, %c0_10] : memref<8x128xf32, #tpu.memory_space<vmem>>, vector<8x128xf32>
      %cst_11 = arith.constant 3.125000e-02 : f32
      %13 = vector.broadcast %cst_11 : f32 to vector<8x128xf32>
      %14 = arith.mulf %12, %13 : vector<8x128xf32>
      %c0_12 = arith.constant 0 : index
      %c0_13 = arith.constant 0 : index
      %15 = vector.load %arg3[%c0_12, %c0_13] : memref<128x8xf32, #tpu.memory_space<vmem>>, vector<128x8xf32>
      %cst_14 = arith.constant dense<0.000000e+00> : vector<8x8xf32>
      %16 = tpu.matmul %14, %15, %cst_14 {dimension_numbers = #tpu.dot_dimension_numbers<[1], [0], [0], [1], [0, 0, 1, 1], [], []>} : vector<8x128xf32>, vector<128x8xf32>, vector<8x8xf32> -> vector<8x8xf32>
      %c0_15 = arith.constant 0 : index
      %c0_16 = arith.constant 0 : index
      %17 = vector.load %arg4[%c0_15, %c0_16] : memref<1x8xf32, #tpu.memory_space<vmem>>, vector<1x8xf32>
      %18 = vector.broadcast %17 : vector<1x8xf32> to vector<8x8xf32>
      %19 = arith.addf %16, %18 : vector<8x8xf32>
      %cst_17 = arith.constant dense<0xFF800000> : vector<8xf32>
      %20 = vector.multi_reduction <maximumf>, %19, %cst_17 [1] : vector<8x8xf32> to vector<8xf32>
      %21 = vector.shape_cast %20 : vector<8xf32> to vector<8x1xf32>
      %22 = vector.broadcast %21 : vector<8x1xf32> to vector<8x8xf32>
      %23 = arith.subf %19, %22 : vector<8x8xf32>
      %24 = math.exp %23 : vector<8x8xf32>
      %cst_18 = arith.constant dense<0.000000e+00> : vector<8xf32>
      %25 = vector.multi_reduction <add>, %24, %cst_18 [1] : vector<8x8xf32> to vector<8xf32>
      %26 = vector.shape_cast %25 : vector<8xf32> to vector<8x1xf32>
      %27 = math.log %26 : vector<8x1xf32>
      %28 = vector.broadcast %27 : vector<8x1xf32> to vector<8x8xf32>
      %29 = arith.subf %23, %28 : vector<8x8xf32>
      %c0_19 = arith.constant 0 : index
      %c0_20 = arith.constant 0 : index
      %30 = vector.load %arg5[%c0_19, %c0_20] : memref<8x8xf32, #tpu.memory_space<vmem>>, vector<8x8xf32>
      tpu.vector_store %arg5[%c0_19, %c0_20], %29 {strides = array<i32>} : memref<8x8xf32, #tpu.memory_space<vmem>>, vector<8x8xf32>,
    } else {
    }
    return
  }
  func.func @transform_0(%arg0: i32, %arg1: i32) -> (i32, i32, i32) {
    %c0_i32 = arith.constant 0 : i32
    %c0_i32_0 = arith.constant 0 : i32
    return %arg0, %arg1, %c0_i32 : i32, i32, i32
  }
  func.func @transform_1(%arg0: i32, %arg1: i32) -> (i32, i32) {
    %c0_i32 = arith.constant 0 : i32
    %c0_i32_0 = arith.constant 0 : i32
    %c0_i32_1 = arith.constant 0 : i32
    return %c0_i32, %c0_i32_0 : i32, i32
  }
  func.func @transform_2(%arg0: i32, %arg1: i32) -> (i32, i32) {
    %c0_i32 = arith.constant 0 : i32
    %c0_i32_0 = arith.constant 0 : i32
    %c0_i32_1 = arith.constant 0 : i32
    return %c0_i32, %c0_i32_0 : i32, i32
  }
  func.func @transform_3(%arg0: i32, %arg1: i32) -> (i32, i32) {
    %c0_i32 = arith.constant 0 : i32
    %c0_i32_0 = arith.constant 0 : i32
    return %arg0, %c0_i32 : i32, i32
  }
}

</mosaic_0001>

<llo_original>
// kernel: tpu_custom_call.1
$region0: #{tpu_custom_call.1}
  #allocation0 [shape = 'u32[]', space=smem, size = 0x4, offset = 0x4, fixed_abs, tag = 'smem constant byte address 0x4 - core index']
  #allocation1 [shape = 'u32[144,128]{1,0:T(1,128)}', space=vmem, size = 0x12000, scoped, tag = 'internal scratch']
  #allocation2 [shape = 'f32[8,128]{1,0:T(8,128)}', space=vmem, size = 0x1000, scoped, tag = 'scratch operand']
  %s0 = inlined_call_operand.hbm [shape: bf16[16,32,128], index: 0, kind: input, shape index: {}]
  %s1 = inlined_call_operand.vmem [shape: f32[128,8], index: 1, kind: input, shape index: {}]
  %s2 = inlined_call_operand.vmem [shape: f32[1,8], index: 2, kind: input, shape index: {}]
  %s3 = inlined_call_operand.vmem [shape: f32[16,8], index: 3, kind: output, shape index: {}]
  %s4 = sld [smem:[#allocation0]]
  $region57: #{tpu_custom_call.1} parent=0
    _
  %s6 = ssub.s32 1, %s4
  %s7 = scalar_select 0, %s6, %s4
  $region1: #{tpu_custom_call.1} parent=0
    #allocation3 [shape = 'u8[131072]{0}', space=vmem, size = 0x20000, scoped, tag = 'input window, operand 0']
    #allocation4 [shape = 's32[2]{0}', space=sflag, size = 0x8, scoped, tag = 'scoped memory for tpu_custom_call.1']
    %8 = vsyncpa [#allocation4], 0
    %s9 = scalar_lea.sflag [#allocation4], 1
    %10 = vsyncpa %s9, 0
    loop: start=0, step=1, limit=4
    $region2: #{tpu_custom_call.1} parent=1 // loop_pre_header
      _
    $region3: #{tpu_custom_call.1} parent=1 // loop_header
      %s12 = sphi 0, %s16
      %p13 = scmp.ge.s32.totalorder %s12, 4
      %s19 = sphi 0, %s31
      %s20 = sphi 0, %s27
      %s21 = sphi 0, %s19
      %s22 = sphi 0, %s20
      %s23 = sphi 0, %s21
      %s24 = sphi 0, %s22
      %s36 = sphi 0, %s38
      %s39 = sphi 0, %s36
      %s40 = sphi 0, %s39
      %s56 = sphi 0, %s40
      %s60 = sphi 0, %s60
      %s62 = sphi 0, %s60
      %s63 = sphi 0, %s62
      %s77 = sphi 0, %s63
      %s81 = sphi 0, %s81
      %s83 = sphi 0, %s81
      %s84 = sphi 0, %s83
      %s98 = sphi 0, %s84
      %s104 = sphi 0, %s106
      %s107 = sphi 0, %s104
      %s108 = sphi 0, %s107
      %s124 = sphi 0, %s108
    $region4: #{tpu_custom_call.1} parent=1 // loop_header_branch
      %15 = sbr.rel (%p13) target = $region8
    $region5: #{tpu_custom_call.1} parent=1 // loop_body
      %s17 = ssub.s32 %s12, 1
      %s18 = ssub.s32 %s12, 2
      %s25 = sadd.s32 1, %s20
      %p26 = scmp.ge.s32.totalorder %s25, 1
      %s27 = scalar_select %p26, 0, %s25
      %s28 = sadd.s32 1, %s19
      %s29 = scalar_select %p26, %s28, %s19
      %p30 = scmp.ge.s32.totalorder %s29, 2
      %s31 = scalar_select %p30, 0, %s29
      %s32 = ssub.s32 %s19, %s31
      %s33 = ssub.s32 %s20, %s27
      %s34 = sor.u32 %s32, %s33
      %p35 = scmp.eq.s32.totalorder %s34, 0
      %s37 = sadd.s32 %s36, 1
      %s38 = scalar_select %p35, %s36, %s37
      %p41 = pneg %p35
      %p42 = scmp.eq.s32.totalorder %s12, 1
      %p43 = por %p41, %p42
      %p44 = scmp.ne.s32.totalorder %s36, %s39
      %p45 = scmp.eq.s32.totalorder %s12, 0
      %p46 = por %p44, %p45
      %p47 = scmp.ne.s32.totalorder %s36, %s39
      %p48 = scmp.eq.s32.totalorder %s17, 1
      %p49 = por %p47, %p48
      %p50 = scmp.ne.s32.totalorder %s39, %s40
      %p51 = scmp.eq.s32.totalorder %s17, 0
      %p52 = por %p50, %p51
      %p53 = scmp.ne.s32.totalorder %s39, %s40
      %p54 = scmp.eq.s32.totalorder %s18, 1
      %p55 = por %p53, %p54
      %p57 = scmp.ne.s32.totalorder %s40, %s56
      %p58 = scmp.eq.s32.totalorder %s18, 0
      %p59 = por %p57, %p58
      %s61 = sadd.s32 %s60, 1
      %p64 = scmp.eq.s32.totalorder %s12, 1
      %p65 = scmp.ne.s32.totalorder %s60, %s62
      %p66 = scmp.eq.s32.totalorder %s12, 0
      %p67 = por %p65, %p66
      %p68 = scmp.ne.s32.totalorder %s60, %s62
      %p69 = scmp.eq.s32.totalorder %s17, 1
      %p70 = por %p68, %p69
      %p71 = scmp.ne.s32.totalorder %s62, %s63
      %p72 = scmp.eq.s32.totalorder %s17, 0
      %p73 = por %p71, %p72
      %p74 = scmp.ne.s32.totalorder %s62, %s63
      %p75 = scmp.eq.s32.totalorder %s18, 1
      %p76 = por %p74, %p75
      %p78 = scmp.ne.s32.totalorder %s63, %s77
      %p79 = scmp.eq.s32.totalorder %s18, 0
      %p80 = por %p78, %p79
      %s82 = sadd.s32 %s81, 1
      %p85 = scmp.eq.s32.totalorder %s12, 1
      %p86 = scmp.ne.s32.totalorder %s81, %s83
      %p87 = scmp.eq.s32.totalorder %s12, 0
      %p88 = por %p86, %p87
      %p89 = scmp.ne.s32.totalorder %s81, %s83
      %p90 = scmp.eq.s32.totalorder %s17, 1
      %p91 = por %p89, %p90
      %p92 = scmp.ne.s32.totalorder %s83, %s84
      %p93 = scmp.eq.s32.totalorder %s17, 0
      %p94 = por %p92, %p93
      %p95 = scmp.ne.s32.totalorder %s83, %s84
      %p96 = scmp.eq.s32.totalorder %s18, 1
      %p97 = por %p95, %p96
      %p99 = scmp.ne.s32.totalorder %s84, %s98
      %p100 = scmp.eq.s32.totalorder %s18, 0
      %p101 = por %p99, %p100
      %s102 = ssub.s32 %s19, %s31
      %p103 = scmp.eq.s32.totalorder %s102, 0
      %s105 = sadd.s32 %s104, 1
      %s106 = scalar_select %p103, %s104, %s105
      %p109 = pneg %p103
      %p110 = scmp.eq.s32.totalorder %s12, 1
      %p111 = por %p109, %p110
      %p112 = scmp.ne.s32.totalorder %s104, %s107
      %p113 = scmp.eq.s32.totalorder %s12, 0
      %p114 = por %p112, %p113
      %p115 = scmp.ne.s32.totalorder %s104, %s107
      %p116 = scmp.eq.s32.totalorder %s17, 1
      %p117 = por %p115, %p116
      %p118 = scmp.ne.s32.totalorder %s107, %s108
      %p119 = scmp.eq.s32.totalorder %s17, 0
      %p120 = por %p118, %p119
      %p121 = scmp.ne.s32.totalorder %s107, %s108
      %p122 = scmp.eq.s32.totalorder %s18, 1
      %p123 = por %p121, %p122
      %p125 = scmp.ne.s32.totalorder %s108, %s124
      %p126 = scmp.eq.s32.totalorder %s18, 0
      %p127 = por %p125, %p126
      %p128 = scmp.le.s32.totalorder 1, %s12
      %p129 = scmp.lt.s32.totalorder %s12, 3
      %p130 = pnand %p128, %p129
      %p131 = pneg %p130
      // Predicated region
      $region9: #{tpu_custom_call.1} parent=5 // pred_check
        _
      $region10: #{tpu_custom_call.1} parent=5 // pred_check_branch
        %133 = sbr.rel (%p130) target = $region12
      $region11: #{tpu_custom_call.1} parent=5 // pred_region
        %s134 = ssub.s32 %s12, 1
        // Predicated region
        $region13: #{tpu_custom_call.1} parent=11 // pred_check
          %p135 = pneg %p73
        $region14: #{tpu_custom_call.1} parent=11 // pred_check_branch
          %137 = sbr.rel (%p135) target = $region16
        $region15: #{tpu_custom_call.1} parent=11 // pred_region
          _
        $region16: #{tpu_custom_call.1} parent=11 // pred_fallthru
          _
        // Predicated region
        $region17: #{tpu_custom_call.1} parent=11 // pred_check
          %p138 = pneg %p94
        $region18: #{tpu_custom_call.1} parent=11 // pred_check_branch
          %140 = sbr.rel (%p138) target = $region20
        $region19: #{tpu_custom_call.1} parent=11 // pred_region
          _
        $region20: #{tpu_custom_call.1} parent=11 // pred_fallthru
          _
      $region12: #{tpu_custom_call.1} parent=5 // pred_fallthru
        _
      %p141 = scmp.lt.s32.totalorder %s12, 2
      // Predicated region
      $region21: #{tpu_custom_call.1} parent=5 // pred_check
        %p142 = pneg %p141
      $region22: #{tpu_custom_call.1} parent=5 // pred_check_branch
        %144 = sbr.rel (%p142) target = $region24
      $region23: #{tpu_custom_call.1} parent=5 // pred_region
        // Predicated region
        $region25: #{tpu_custom_call.1} parent=23 // pred_check
          %p145 = pneg %p46
        $region26: #{tpu_custom_call.1} parent=23 // pred_check_branch
          %147 = sbr.rel (%p145) target = $region28
        $region27: #{tpu_custom_call.1} parent=23 // pred_region
          %s148 = sand.u32 %s36, 1
          %s149 = scalar_lea.sflag [#allocation4], %s148
          %s150 = sand.u32 %s36, 1
          %s151 = smul.addr %s150, 128
          %s152 = scalar_lea.vmem [#allocation3], %s151
          %s153 = smul.u32 8, %s19
          %s154 = smul.u32 4, %s20
          %s156 = ssub.s32 2048, 2048
          %157 = vsyncadd %s149, %s156
          %s158 = smul.addr %s153, 4
          %s159 = sadd.s32 %s154, %s158
          %s160 = smul.addr %s159, 64
          %s161 = scalar_lea.hbm %s0, %s160
          %s162 = sshll.u32 %s152, 4
          %s163 = int_to_ptr.vmem [resolvable:$true] %s162
          %168 = dma.hbm_to_vmem [thread:$0]  %s161, 2048, %s163, %s149, 64, 64, 4
        $region28: #{tpu_custom_call.1} parent=23 // pred_fallthru
          _
      $region24: #{tpu_custom_call.1} parent=5 // pred_fallthru
        _
      %p169 = scmp.le.s32.totalorder 1, %s12
      %p170 = scmp.lt.s32.totalorder %s12, 3
      %p171 = pnand %p169, %p170
      %p172 = pneg %p171
      // Predicated region
      $region29: #{tpu_custom_call.1} parent=5 // pred_check
        _
      $region30: #{tpu_custom_call.1} parent=5 // pred_check_branch
        %174 = sbr.rel (%p171) target = $region32
      $region31: #{tpu_custom_call.1} parent=5 // pred_region
        %s175 = ssub.s32 %s12, 1
        %s176 = sand.u32 %s39, 1
        %s177 = scalar_lea.sflag [#allocation4], %s176
        %s178 = sand.u32 %s39, 1
        %s179 = smul.addr %s178, 128
        %s180 = scalar_lea.vmem [#allocation3], %s179
        // Predicated region
        $region33: #{tpu_custom_call.1} parent=31 // pred_check
          %p181 = pneg %p52
        $region34: #{tpu_custom_call.1} parent=31 // pred_check_branch
          %183 = sbr.rel (%p181) target = $region36
        $region35: #{tpu_custom_call.1} parent=31 // pred_region
          %184 = dma.done %s177, 2048
        $region36: #{tpu_custom_call.1} parent=31 // pred_fallthru
          _
        %s185 = sand.u32 %s39, 1
        %s186 = scalar_lea.sflag [#allocation4], %s185
        %s187 = sand.u32 %s39, 1
        %s188 = smul.addr %s187, 128
        %s189 = scalar_lea.vmem [#allocation3], %s188
        %p190 = pneg %p52
        %p191 = pneg %p49
        %p192 = pneg %p73
        %p193 = pneg %p70
        %p194 = pneg %p94
        %p195 = pneg %p91
        %p196 = pneg %p120
        %p197 = pneg %p117
        %p198 = scmp.lt.s32.totalorder %s21, 1
        %s199 = scalar_select %p198, %s21, 1
        %s200 = smul.addr %s199, 8
        %s201 = scalar_lea.vmem %s3, %s200
        %s202 = smul.u32 8, %s21
        %s203 = smul.u32 4, %s22
        %p204 = scmp.lt.s32.totalorder %s21, 1
        %s205 = scalar_select %p204, %s21, 1
        %s206 = smul.addr %s205, 8
        %s207 = scalar_lea.vmem %s3, %s206
        %p208 = scmp.eq.s32.totalorder %s22, 0
        // Predicated region
        $region37: #{tpu_custom_call.1} parent=31 // pred_check
          %p209 = pneg %p208
        $region38: #{tpu_custom_call.1} parent=31 // pred_check_branch
          %211 = sbr.rel (%p209) target = $region40
        $region39: #{tpu_custom_call.1} parent=31 // pred_region
          %212 = vst [vmem:[#allocation2] sm:$0xff] 0.0
        $region40: #{tpu_custom_call.1} parent=31 // pred_fallthru
          _
        %v213 = vld [vmem:[#allocation2] sm:$0xff]
        %v214 = vld [vmem:[%s180] sm:$0xf]
        %v215 = vld [vmem:[%s180 + $0x4] sm:$0xf]
        %v216 = vld [vmem:[%s180 + $0x8] sm:$0xf]
        %v217 = vld [vmem:[%s180 + $0xc] sm:$0xf]
        %v218 = vld [vmem:[%s180 + $0x10] sm:$0xf]
        %v219 = vld [vmem:[%s180 + $0x14] sm:$0xf]
        %v220 = vld [vmem:[%s180 + $0x18] sm:$0xf]
        %v221 = vld [vmem:[%s180 + $0x1c] sm:$0xf]
        %v222 = vld [vmem:[%s180 + $0x20] sm:$0xf]
        %v223 = vld [vmem:[%s180 + $0x24] sm:$0xf]
        %v224 = vld [vmem:[%s180 + $0x28] sm:$0xf]
        %v225 = vld [vmem:[%s180 + $0x2c] sm:$0xf]
        %v226 = vld [vmem:[%s180 + $0x30] sm:$0xf]
        %v227 = vld [vmem:[%s180 + $0x34] sm:$0xf]
        %v228 = vld [vmem:[%s180 + $0x38] sm:$0xf]
        %v229 = vld [vmem:[%s180 + $0x3c] sm:$0xf]
        %v230 = vld [vmem:[%s180 + $0x40] sm:$0xf]
        %v231 = vld [vmem:[%s180 + $0x44] sm:$0xf]
        %v232 = vld [vmem:[%s180 + $0x48] sm:$0xf]
        %v233 = vld [vmem:[%s180 + $0x4c] sm:$0xf]
        %v234 = vld [vmem:[%s180 + $0x50] sm:$0xf]
        %v235 = vld [vmem:[%s180 + $0x54] sm:$0xf]
        %v236 = vld [vmem:[%s180 + $0x58] sm:$0xf]
        %v237 = vld [vmem:[%s180 + $0x5c] sm:$0xf]
        %v238 = vld [vmem:[%s180 + $0x60] sm:$0xf]
        %v239 = vld [vmem:[%s180 + $0x64] sm:$0xf]
        %v240 = vld [vmem:[%s180 + $0x68] sm:$0xf]
        %v241 = vld [vmem:[%s180 + $0x6c] sm:$0xf]
        %v242 = vld [vmem:[%s180 + $0x70] sm:$0xf]
        %v243 = vld [vmem:[%s180 + $0x74] sm:$0xf]
        %v244 = vld [vmem:[%s180 + $0x78] sm:$0xf]
        %v245 = vld [vmem:[%s180 + $0x7c] sm:$0xf]
        %v246 = vunpack.c.l.bf16 %v214
        %v247 = vunpack.c.l.bf16 %v215
        %v248 = vunpack.c.l.bf16 %v216
        %v249 = vunpack.c.l.bf16 %v217
        %v250 = vunpack.c.l.bf16 %v218
        %v251 = vunpack.c.l.bf16 %v219
        %v252 = vunpack.c.l.bf16 %v220
        %v253 = vunpack.c.l.bf16 %v221
        %v254 = vunpack.c.l.bf16 %v222
        %v255 = vunpack.c.l.bf16 %v223
        %v256 = vunpack.c.l.bf16 %v224
        %v257 = vunpack.c.l.bf16 %v225
        %v258 = vunpack.c.l.bf16 %v226
        %v259 = vunpack.c.l.bf16 %v227
        %v260 = vunpack.c.l.bf16 %v228
        %v261 = vunpack.c.l.bf16 %v229
        %v262 = vunpack.c.l.bf16 %v230
        %v263 = vunpack.c.l.bf16 %v231
        %v264 = vunpack.c.l.bf16 %v232
        %v265 = vunpack.c.l.bf16 %v233
        %v266 = vunpack.c.l.bf16 %v234
        %v267 = vunpack.c.l.bf16 %v235
        %v268 = vunpack.c.l.bf16 %v236
        %v269 = vunpack.c.l.bf16 %v237
        %v270 = vunpack.c.l.bf16 %v238
        %v271 = vunpack.c.l.bf16 %v239
        %v272 = vunpack.c.l.bf16 %v240
        %v273 = vunpack.c.l.bf16 %v241
        %v274 = vunpack.c.l.bf16 %v242
        %v275 = vunpack.c.l.bf16 %v243
        %v276 = vunpack.c.l.bf16 %v244
        %v277 = vunpack.c.l.bf16 %v245
        %v278 = vadd.f32 %v246, %v247
        %v279 = vadd.f32 %v278, %v248
        %v280 = vadd.f32 %v279, %v249
        %v281 = vrot.slane %v280, 4
        %v282 = vadd.f32 %v280, %v281
        %v283 = vrot.slane %v282, 2
        %v284 = vadd.f32 %v282, %v283
        %v285 = vrot.slane %v284, 1
        %v286 = vadd.f32 %v284, %v285
        %v287 = vadd.f32 %v250, %v251
        %v288 = vadd.f32 %v287, %v252
        %v289 = vadd.f32 %v288, %v253
        %v290 = vrot.slane %v289, 4
        %v291 = vadd.f32 %v289, %v290
        %v292 = vrot.slane %v291, 2
        %v293 = vadd.f32 %v291, %v292
        %v294 = vrot.slane %v293, 1
        %v295 = vadd.f32 %v293, %v294
        %v296 = vadd.f32 %v254, %v255
        %v297 = vadd.f32 %v296, %v256
        %v298 = vadd.f32 %v297, %v257
        %v299 = vrot.slane %v298, 4
        %v300 = vadd.f32 %v298, %v299
        %v301 = vrot.slane %v300, 2
        %v302 = vadd.f32 %v300, %v301
        %v303 = vrot.slane %v302, 1
        %v304 = vadd.f32 %v302, %v303
        %v305 = vadd.f32 %v258, %v259
        %v306 = vadd.f32 %v305, %v260
        %v307 = vadd.f32 %v306, %v261
        %v308 = vrot.slane %v307, 4
        %v309 = vadd.f32 %v307, %v308
        %v310 = vrot.slane %v309, 2
        %v311 = vadd.f32 %v309, %v310
        %v312 = vrot.slane %v311, 1
        %v313 = vadd.f32 %v311, %v312
        %v314 = vadd.f32 %v262, %v263
        %v315 = vadd.f32 %v314, %v264
        %v316 = vadd.f32 %v315, %v265
        %v317 = vrot.slane %v316, 4
        %v318 = vadd.f32 %v316, %v317
        %v319 = vrot.slane %v318, 2
        %v320 = vadd.f32 %v318, %v319
        %v321 = vrot.slane %v320, 1
        %v322 = vadd.f32 %v320, %v321
        %v323 = vadd.f32 %v266, %v267
        %v324 = vadd.f32 %v323, %v268
        %v325 = vadd.f32 %v324, %v269
        %v326 = vrot.slane %v325, 4
        %v327 = vadd.f32 %v325, %v326
        %v328 = vrot.slane %v327, 2
        %v329 = vadd.f32 %v327, %v328
        %v330 = vrot.slane %v329, 1
        %v331 = vadd.f32 %v329, %v330
        %v332 = vadd.f32 %v270, %v271
        %v333 = vadd.f32 %v332, %v272
        %v334 = vadd.f32 %v333, %v273
        %v335 = vrot.slane %v334, 4
        %v336 = vadd.f32 %v334, %v335
        %v337 = vrot.slane %v336, 2
        %v338 = vadd.f32 %v336, %v337
        %v339 = vrot.slane %v338, 1
        %v340 = vadd.f32 %v338, %v339
        %v341 = vadd.f32 %v274, %v275
        %v342 = vadd.f32 %v341, %v276
        %v343 = vadd.f32 %v342, %v277
        %v344 = vrot.slane %v343, 4
        %v345 = vadd.f32 %v343, %v344
        %v346 = vrot.slane %v345, 2
        %v347 = vadd.f32 %v345, %v346
        %v348 = vrot.slane %v347, 1
        %v349 = vadd.f32 %v347, %v348
        %vm358 = vcmask 1041409
        %v359 = vsel %vm358, %v295, %v286
        %vm360 = vcmask 1042434
        %v361 = vsel %vm360, %v304, %v359
        %vm362 = vcmask 1043459
        %v363 = vsel %vm362, %v313, %v361
        %vm364 = vcmask 1044484
        %v365 = vsel %vm364, %v322, %v363
        %vm366 = vcmask 1045509
        %v367 = vsel %vm366, %v331, %v365
        %vm368 = vcmask 1046534
        %v369 = vsel %vm368, %v340, %v367
        %vm370 = vcmask 1047559
        %v371 = vsel %vm370, %v349, %v369
        %v373 = vadd.f32 %v213, %v371
        %374 = vst [vmem:[#allocation2] sm:$0xff] %v373
        // Predicated region
        $region41: #{tpu_custom_call.1} parent=31 // pred_check
          %p375 = pneg %p208
        $region42: #{tpu_custom_call.1} parent=31 // pred_check_branch
          %377 = sbr.rel (%p375) target = $region44
        $region43: #{tpu_custom_call.1} parent=31 // pred_region
          %v378 = vld [vmem:[#allocation2] sm:$0xff]
          %v379 = vmul.f32 %v378, 0.03125
          %v380 = vld [vmem:[%s1] sm:$0xff]
          %v381 = vld [vmem:[%s1 + $0x8] sm:$0xff]
          %v382 = vld [vmem:[%s1 + $0x10] sm:$0xff]
          %v383 = vld [vmem:[%s1 + $0x18] sm:$0xff]
          %v384 = vld [vmem:[%s1 + $0x20] sm:$0xff]
          %v385 = vld [vmem:[%s1 + $0x28] sm:$0xff]
          %v386 = vld [vmem:[%s1 + $0x30] sm:$0xff]
          %v387 = vld [vmem:[%s1 + $0x38] sm:$0xff]
          %v388 = vld [vmem:[%s1 + $0x40] sm:$0xff]
          %v389 = vld [vmem:[%s1 + $0x48] sm:$0xff]
          %v390 = vld [vmem:[%s1 + $0x50] sm:$0xff]
          %v391 = vld [vmem:[%s1 + $0x58] sm:$0xff]
          %v392 = vld [vmem:[%s1 + $0x60] sm:$0xff]
          %v393 = vld [vmem:[%s1 + $0x68] sm:$0xff]
          %v394 = vld [vmem:[%s1 + $0x70] sm:$0xff]
          %v395 = vld [vmem:[%s1 + $0x78] sm:$0xff]
          %v396 = vld [vmem:[%s2] sm:$0x1]
          %v398 = vlaneseq
          %v399 = vshrl.u32 %v398, 7
          %v400 = vsub.s32 0, %v399
          %v401 = vrot.slane %v396, %v400
          %403 = vmatprep.subr.mxu0 0.0
          %404 = vmatpush1.msra.mxu0 %v380
          %405 = vmatprep.subr.mxu0 0.0
          %406 = vmatpush1.msra.mxu0 %v381
          %407 = vmatprep.subr.mxu0 0.0
          %408 = vmatpush1.msra.mxu0 %v382
          %409 = vmatprep.subr.mxu0 0.0
          %410 = vmatpush1.msra.mxu0 %v383
          %411 = vmatprep.subr.mxu0 0.0
          %412 = vmatpush1.msra.mxu0 %v384
          %413 = vmatprep.subr.mxu0 0.0
          %414 = vmatpush1.msra.mxu0 %v385
          %415 = vmatprep.subr.mxu0 0.0
          %416 = vmatpush1.msra.mxu0 %v386
          %417 = vmatprep.subr.mxu0 0.0
          %418 = vmatpush1.msra.mxu0 %v387
          %419 = vmatprep.subr.mxu0 0.0
          %420 = vmatpush1.msra.mxu0 %v388
          %421 = vmatprep.subr.mxu0 0.0
          %422 = vmatpush1.msra.mxu0 %v389
          %423 = vmatprep.subr.mxu0 0.0
          %424 = vmatpush1.msra.mxu0 %v390
          %425 = vmatprep.subr.mxu0 0.0
          %426 = vmatpush1.msra.mxu0 %v391
          %427 = vmatprep.subr.mxu0 0.0
          %428 = vmatpush1.msra.mxu0 %v392
          %429 = vmatprep.subr.mxu0 0.0
          %430 = vmatpush1.msra.mxu0 %v393
          %431 = vmatprep.subr.mxu0 0.0
          %432 = vmatpush1.msra.mxu0 %v394
          %433 = vmatprep.subr.mxu0 0.0
          %434 = vmatpush1.msra.mxu0 %v395
          %435 = vmatprep.subr.mxu0 0.0
          %436 = vmatpush1.msra.mxu0 0.0
          %437 = vmatprep.subr.mxu0 0.0
          %438 = vmatpush1.msra.mxu0 0.0
          %439 = vmatprep.subr.mxu0 0.0
          %440 = vmatpush1.msra.mxu0 0.0
          %441 = vmatprep.subr.mxu0 0.0
          %442 = vmatpush1.msra.mxu0 0.0
          %443 = vmatprep.subr.mxu0 0.0
          %444 = vmatpush1.msra.mxu0 0.0
          %445 = vmatprep.subr.mxu0 0.0
          %446 = vmatpush1.msra.mxu0 0.0
          %447 = vmatprep.subr.mxu0 0.0
          %448 = vmatpush1.msra.mxu0 0.0
          %449 = vmatprep.subr.mxu0 0.0
          %450 = vmatpush1.msra.mxu0 0.0
          %451 = vmatprep.subr.mxu0 0.0
          %452 = vmatpush1.msra.mxu0 0.0
          %453 = vmatprep.subr.mxu0 0.0
          %454 = vmatpush1.msra.mxu0 0.0
          %455 = vmatprep.subr.mxu0 0.0
          %456 = vmatpush1.msra.mxu0 0.0
          %457 = vmatprep.subr.mxu0 0.0
          %458 = vmatpush1.msra.mxu0 0.0
          %459 = vmatprep.subr.mxu0 0.0
          %460 = vmatpush1.msra.mxu0 0.0
          %461 = vmatprep.subr.mxu0 0.0
          %462 = vmatpush1.msra.mxu0 0.0
          %463 = vmatprep.subr.mxu0 0.0
          %464 = vmatpush1.msra.mxu0 0.0
          %465 = vmatprep.subr.mxu0 0.0
          %466 = vmatpush1.msra.mxu0 0.0
          %467 = vmatprep.mubr.f32.mxu0 0.0
          %468 = vmatmul.mubr.f32.gmra.mrb[0].mxu0 %v379
          %v469 = vpop.f32.mrb[0].mxu0
          %v470 = vadd.f32 %v401, %v469
          %v471 = vpop.f32.mrb[0].mxu0
          %472 = vdwg.mxu0
          %vm473 = vcmask 64512
          %v474 = vsel %vm473, %v470, -inf
          %475 = vmax.xlane.f32.xlu0 %v474
          %v476 = vpop.xlane.xlu0 %475
          %v477 = vsub.f32 %v470, %v476
          %v478 = vmul.f32 %v477, 1.442695
          %v479 = vpow.pop %v478
          %v480 = vsel %vm473, %v479, 0.0
          %481 = vadd.xlane.f32.xlu0 %v480
          %v482 = vpop.xlane.xlu0 %481
          %v483 = vlog2.pop %v482
          %v484 = vmul.f32 %v483, 0.6931472
          %v485 = vsub.f32 %v477, %v484
          %486 = vst.msk [vmem:[%s207] sm:$0xff] %vm473, %v485
        $region44: #{tpu_custom_call.1} parent=31 // pred_fallthru
          _
        %p487 = scmp.lt.s32.totalorder %s21, 1
        %s488 = scalar_select %p487, %s21, 1
        %s489 = smul.addr %s488, 8
        %s490 = scalar_lea.vmem %s3, %s489
        // Predicated region
        $region45: #{tpu_custom_call.1} parent=31 // pred_check
          %p491 = pneg %p117
        $region46: #{tpu_custom_call.1} parent=31 // pred_check_branch
          %493 = sbr.rel (%p491) target = $region48
        $region47: #{tpu_custom_call.1} parent=31 // pred_region
          _
        $region48: #{tpu_custom_call.1} parent=31 // pred_fallthru
          _
      $region32: #{tpu_custom_call.1} parent=5 // pred_fallthru
        _
      %p494 = scmp.le.s32.totalorder 2, %s12
      // Predicated region
      $region49: #{tpu_custom_call.1} parent=5 // pred_check
        %p495 = pneg %p494
      $region50: #{tpu_custom_call.1} parent=5 // pred_check_branch
        %497 = sbr.rel (%p495) target = $region52
      $region51: #{tpu_custom_call.1} parent=5 // pred_region
        %s498 = ssub.s32 %s12, 2
        // Predicated region
        $region53: #{tpu_custom_call.1} parent=51 // pred_check
          %p499 = pneg %p123
        $region54: #{tpu_custom_call.1} parent=51 // pred_check_branch
          %501 = sbr.rel (%p499) target = $region56
        $region55: #{tpu_custom_call.1} parent=51 // pred_region
          %p502 = scmp.lt.s32.totalorder %s23, 1
          %s503 = scalar_select %p502, %s23, 1
          %s504 = smul.addr %s503, 8
          %s505 = scalar_lea.vmem %s3, %s504
        $region56: #{tpu_custom_call.1} parent=51 // pred_fallthru
          _
      $region52: #{tpu_custom_call.1} parent=5 // pred_fallthru
        _
    $region6: #{tpu_custom_call.1} parent=1 // loop_footer
      %s16 = sadd.s32 1, %s12
    $region7: #{tpu_custom_call.1} parent=1 // loop_footer_branch
      %11 = sbr.rel target = $region3
    $region8: #{tpu_custom_call.1} parent=1 // loop_exit
      _
    %506 = vsyncpa [#allocation4], 1
    %s507 = scalar_lea.sflag [#allocation4], 1
    %508 = vsyncpa %s507, 1

</llo_original>
